<compile_context>
chip_gen: v6e
topology: v6e:2x2x1
jax: 0.10.0
libtpu: 0.0.40
codegen_flags: <defaults>
</compile_context>

<pallas_src>
import jax
import jax.numpy as jnp
from jax.experimental import pallas as pl
from jax.experimental.pallas import tpu as pltpu


def _copy_kernel(x_ref, o_ref):
    # Pure element-wise pass-through of the current (tile_rows, lane) tile.
    o_ref[...] = x_ref[...]


_TILE_BYTES = 2 * 1024 * 1024  # ~2 MiB per buffer: safe on v5e/v6e/v7x.


def random_affine_forward(img: jax.Array) -> jax.Array:
    """Pallas implementation of RandomAffine.forward (identity on tensors)."""
    if not isinstance(img, jax.Array):
        raise TypeError("img should be PIL Image or Tensor")

    orig_shape = img.shape
    dtype = img.dtype
    itemsize = jnp.dtype(dtype).itemsize
    total = int(img.size)

    # --- Lane-dense flatten (wrapper-side layout plumbing, not compute). ---
    # Prefer a lane width that divides the element count exactly (no pad);
    # otherwise pad the flat view up to a 1024-lane multiple.
    lane = None
    for cand in (1024, 512, 256, 128):
        if total % cand == 0:
            lane = cand
            break
    if lane is None:
        lane = 1024
        padded_total = pl.cdiv(total, lane) * lane
        flat = jnp.pad(img.reshape(-1), (0, padded_total - total))
    else:
        flat = img.reshape(-1)

    rows = flat.size // lane
    x2d = flat.reshape(rows, lane)

    # --- Row tile: ~2 MiB per buffer, aligned to sublane packing. ---
    # f32 -> 8 sublanes/vreg row-pack, bf16 -> 16, int8 -> 32.
    sublane_pack = 8 * max(1, 4 // itemsize)
    tile_rows = max(sublane_pack, _TILE_BYTES // (lane * itemsize))

    if rows <= tile_rows:
        # Full-extent block: exempt from the (8,128) divisibility rule.
        tile_rows = rows
        grid_rows = 1
    else:
        grid_rows = pl.cdiv(rows, tile_rows)
        padded_rows = grid_rows * tile_rows
        if padded_rows != rows:
            x2d = jnp.pad(x2d, ((0, padded_rows - rows), (0, 0)))

    block = (tile_rows, lane)
    spec = pl.BlockSpec(block, lambda i: (i, 0))

    out2d = pl.pallas_call(
        _copy_kernel,
        out_shape=jax.ShapeDtypeStruct(x2d.shape, dtype),
        grid_spec=pltpu.PrefetchScalarGridSpec(
            num_scalar_prefetch=0,
            grid=(grid_rows,),
            in_specs=[spec],
            out_specs=spec,
        ),
        compiler_params=pltpu.CompilerParams(
            # Parallel so the row tiles shard across v7x's 2 TensorCores.
            dimension_semantics=("parallel",),
        ),
        cost_estimate=pl.CostEstimate(
            flops=0,
            transcendentals=0,
            bytes_accessed=2 * total * itemsize,
        ),
    )(x2d)

    out_flat = out2d.reshape(-1)
    if out_flat.size != total:
        out_flat = out_flat[:total]
    return out_flat.reshape(orig_shape)


class RandomAffine:
    """JAX/Pallas port of the pytea RandomAffine stub (identity forward)."""

    def __init__(self, degrees, translate=None, scale=None, shear=None,
                 interpolation=None, fill=0, fillcolor=None, resample=None):
        # Reference __init__ stores nothing; parameters accepted and ignored.
        pass

    def __call__(self, img):
        return self.forward(img)

    def forward(self, img):
        if isinstance(img, jax.Array):
            return random_affine_forward(img)
        raise TypeError("img should be PIL Image or Tensor")


if __name__ == "__main__":
    key = jax.random.PRNGKey(0)
    # Small NCHW image batch: batch=2, channels=4, spatial=16x16.
    x = jax.random.normal(key, (2, 4, 16, 16), dtype=jnp.float32)

    module = RandomAffine(degrees=15, translate=(0.1, 0.1), scale=(0.9, 1.1))
    out = module(x)
    out = jax.block_until_ready(out)

    assert out.shape == x.shape and out.dtype == x.dtype
    assert bool(jnp.array_equal(out, x))
    print("KERNEL_OK")
</pallas_src>

<mosaic_0001>
module attributes {stable_mosaic.version = 11 : i64} {
  func.func @_copy_kernel(%arg0: i32, %arg1: memref<2x1024xf32, #tpu.memory_space<vmem>>, %arg2: memref<2x1024xf32, #tpu.memory_space<vmem>>) attributes {dimension_semantics = [#tpu.dimension_semantics<parallel>], iteration_bounds = array<i64: 1>, scalar_prefetch = 0 : i64, scratch_operands = 0 : i64, tpu.core_type = #tpu.core_type<tc>, window_params = [{transform_indices = @transform_0, window_bounds = array<i64: 2, 1024>}, {transform_indices = @transform_1, window_bounds = array<i64: 2, 1024>}]} {
    %c0 = arith.constant 0 : index
    %c0_0 = arith.constant 0 : index
    %0 = vector.load %arg1[%c0, %c0_0] : memref<2x1024xf32, #tpu.memory_space<vmem>>, vector<2x1024xf32>
    %c0_1 = arith.constant 0 : index
    %c0_2 = arith.constant 0 : index
    %1 = vector.load %arg2[%c0_1, %c0_2] : memref<2x1024xf32, #tpu.memory_space<vmem>>, vector<2x1024xf32>
    tpu.vector_store %arg2[%c0_1, %c0_2], %0 {strides = array<i32>} : memref<2x1024xf32, #tpu.memory_space<vmem>>, vector<2x1024xf32>,
    return
  }
  func.func @transform_0(%arg0: i32) -> (i32, i32) {
    %c0_i32 = arith.constant 0 : i32
    %c0_i32_0 = arith.constant 0 : i32
    return %arg0, %c0_i32 : i32, i32
  }
  func.func @transform_1(%arg0: i32) -> (i32, i32) {
    %c0_i32 = arith.constant 0 : i32
    %c0_i32_0 = arith.constant 0 : i32
    return %arg0, %c0_i32 : i32, i32
  }
}

</mosaic_0001>

<llo_original>
// kernel: tpu_custom_call.1
$region0: #{tpu_custom_call.1}
  #allocation0 [shape = 'u32[]', space=smem, size = 0x4, offset = 0x4, fixed_abs, tag = 'smem constant byte address 0x4 - core index']
  #allocation1 [shape = 'u32[144,128]{1,0:T(1,128)}', space=vmem, size = 0x12000, scoped, tag = 'internal scratch']
  %s0 = inlined_call_operand.hbm [shape: f32[2,1024], index: 0, kind: input, shape index: {}]
  %s1 = inlined_call_operand.hbm [shape: f32[2,1024], index: 1, kind: output, shape index: {}]
  %s2 = sld [smem:[#allocation0]]
  $region18: #{tpu_custom_call.1} parent=0
    _
  %s4 = ssub.s32 1, %s2
  %s5 = scalar_select 0, %s4, %s2
  $region1: #{tpu_custom_call.1} parent=0
    #allocation2 [shape = 'u8[8192]{0}', space=vmem, size = 0x2000, scoped, tag = 'input window, operand 0, single buffered']
    #allocation3 [shape = 's32[1]{0}', space=sflag, size = 0x4, scoped, tag = 'scoped memory for tpu_custom_call.1']
    #allocation4 [shape = 's32[1]{0}', space=sflag, size = 0x4, scoped, tag = 'scoped memory for tpu_custom_call.1']
    #allocation5 [shape = 'u8[8192]{0}', space=vmem, size = 0x2000, scoped, tag = 'output window, operand 0, single buffered']
    %6 = vsyncpa [#allocation3], 0
    %7 = vsyncpa [#allocation4], 0
    // Predicated region
    $region2: #{tpu_custom_call.1} parent=1 // pred_check
      _
    $region3: #{tpu_custom_call.1} parent=1 // pred_check_branch
      %9 = sbr.rel (0) target = $region5
    $region4: #{tpu_custom_call.1} parent=1 // pred_region
      %s11 = ssub.s32 256, 256
      %12 = vsyncadd [#allocation3], %s11
      %s14 = sshll.u32 [#allocation2], 4
      %s15 = int_to_ptr.vmem [resolvable:$true] %s14
      %17 = dma.hbm_to_vmem [thread:$0]  %s0, 256, %s15, [#allocation3]
    $region5: #{tpu_custom_call.1} parent=1 // pred_fallthru
      _
    // Predicated region
    $region6: #{tpu_custom_call.1} parent=1 // pred_check
      _
    $region7: #{tpu_custom_call.1} parent=1 // pred_check_branch
      %19 = sbr.rel (0) target = $region9
    $region8: #{tpu_custom_call.1} parent=1 // pred_region
      %20 = dma.done [#allocation3], 256
    $region9: #{tpu_custom_call.1} parent=1 // pred_fallthru
      _
    %v21 = vld [vmem:[#allocation2] sm:$0xff]
    %v22 = vld [vmem:[#allocation2 + $0x8] sm:$0xff]
    %23 = vst [vmem:[#allocation5] sm:$0xff] %v21
    %24 = vst [vmem:[#allocation5 + $0x8] sm:$0xff] %v22
    // Predicated region
    $region10: #{tpu_custom_call.1} parent=1 // pred_check
      _
    $region11: #{tpu_custom_call.1} parent=1 // pred_check_branch
      %26 = sbr.rel (0) target = $region13
    $region12: #{tpu_custom_call.1} parent=1 // pred_region
      %s28 = ssub.s32 256, 256
      %29 = vsyncadd [#allocation4], %s28
      %s31 = sshll.u32 [#allocation5], 4
      %s32 = int_to_ptr.vmem [resolvable:$true] %s31
      %34 = dma.vmem_to_hbm [thread:$0]  %s32, 256, %s1, [#allocation4]
    $region13: #{tpu_custom_call.1} parent=1 // pred_fallthru
      _
    // Predicated region
    $region14: #{tpu_custom_call.1} parent=1 // pred_check
      _
    $region15: #{tpu_custom_call.1} parent=1 // pred_check_branch
      %36 = sbr.rel (0) target = $region17
    $region16: #{tpu_custom_call.1} parent=1 // pred_region
      %37 = dma.done [#allocation4], 256
    $region17: #{tpu_custom_call.1} parent=1 // pred_fallthru
      _
    %38 = vsyncpa [#allocation3], 1
    %39 = vsyncpa [#allocation4], 1

</llo_original>
